<compile_context>
chip_gen: v7x
topology: tpu7x:2x2x1
jax: 0.10.0
libtpu: 0.0.40
codegen_flags: <defaults>
</compile_context>

<pallas_src>
import functools
import math

import numpy as np
import jax
import jax.numpy as jnp
from jax.experimental import pallas as pl
from jax.experimental.pallas import tpu as pltpu

BN_EPS = 1e-5
LANE = 128       # lane width (last dim)
SUBLANE = 8      # f32 sublane width (second-to-last dim)


def _round_up(n, m):
    return ((n + m - 1) // m) * m


def _vmem_budget_bytes():
    """Generation-aware scoped-VMEM budget: ~3/4 of physical VMEM, capped at 96 MiB.
    v5e/v6e (128 MiB physical) -> 96 MiB; v7x (64 MiB per TensorCore) -> 48 MiB."""
    cap = 64 << 20
    try:
        info = pltpu.get_tpu_info()
        for name in ("vmem_capacity_bytes", "vmem_bytes", "vmem_size_bytes"):
            v = getattr(info, name, None)
            if v:
                cap = int(v)
                break
    except Exception:
        pass
    return max(16 << 20, min((cap * 3) // 4, 96 << 20))


def _batch_tiling(batch, widest_feat_padded, vmem_budget, resident_bytes,
                  max_batch_tile=None):
    """Choose (batch_tile, padded_batch, num_tiles) with bounded padding waste:
    batch is padded only to 8 rows, then split into near-equal tiles (each a
    multiple of 8 rows) whose f32 activation slab fits the per-buffer allowance."""
    avail = max(vmem_budget - resident_bytes, 2 << 20)
    slab_cap = max(256 * 1024, avail // 6)     # ~3 in-buffers + 2 out-buffers + margin
    tb_cap = (slab_cap // (widest_feat_padded * 4)) // SUBLANE * SUBLANE
    tb_cap = max(SUBLANE, min(2048, tb_cap))
    if max_batch_tile is not None:
        tb_cap = max(SUBLANE, min(tb_cap, (max_batch_tile // SUBLANE) * SUBLANE))
    bp8 = _round_up(batch, SUBLANE)
    if bp8 <= tb_cap:
        return bp8, bp8, 1
    nt = -(-bp8 // tb_cap)                      # cdiv
    tb = _round_up(-(-bp8 // nt), SUBLANE)      # near-equal tiles; waste < nt*8 rows
    return tb, nt * tb, nt


def _x_spec(block_shape, index_map, nt):
    """Activation-stream BlockSpec; 3-deep input buffering when the grid is deep."""
    if nt >= 3:
        try:
            return pl.BlockSpec(block_shape, index_map, pipeline_mode=pl.Buffered(3))
        except Exception:
            pass
    return pl.BlockSpec(block_shape, index_map)


# ----------------------------------------------------------------------------------
# Fully-resident single-kernel path (small nets): whole forward in one pallas_call.
# ----------------------------------------------------------------------------------
def _fused_forward_kernel(*refs, num_layers, n_rows, mask_rows):
    # refs: x, (gb_0, w_0), ..., (gb_{L-1}, w_{L-1}), b_last, out
    x_ref = refs[0]
    b_ref = refs[1 + 2 * num_layers]
    out_ref = refs[2 + 2 * num_layers]

    inv_n = 1.0 / float(n_rows)
    valid = None
    if mask_rows:
        row = jax.lax.broadcasted_iota(jnp.int32, (x_ref.shape[0], 1), 0)
        valid = row < n_rows

    h = x_ref[...].astype(jnp.float32)          # padded batch rows are exact zeros
    for i in range(num_layers):
        gb = refs[1 + 2 * i][...]
        w = refs[2 + 2 * i][...]
        # Training-mode BatchNorm over the full (resident) batch, all in f32.
        mean = jnp.sum(h, axis=0, keepdims=True) * inv_n
        var = jnp.maximum(jnp.sum(h * h, axis=0, keepdims=True) * inv_n
                          - mean * mean, 0.0)
        scale = gb[0:1, :] * jax.lax.rsqrt(var + BN_EPS)
        shift = gb[1:2, :] - mean * scale
        h = h * scale + shift
        if i >= 1:
            h = jnp.maximum(h, 0.0)             # relu after BN_i (i>=1); dropout p=0
        h = jnp.dot(h.astype(w.dtype), w, preferred_element_type=jnp.float32)
        if mask_rows:
            h = jnp.where(valid, h, 0.0)        # keep padded rows at 0 for next stats
        # hidden-layer Linear biases cancel exactly inside the following BatchNorm
    out_ref[...] = jnp.maximum(h + b_ref[...], 0.0)


def _fused_forward(a, packed, n_rows, vmem_limit):
    bp, _ = a.shape
    num_layers = len(packed["cfg"]) - 1
    cout_last = packed["w"][-1].shape[1]

    operands = [a]
    for i in range(num_layers):
        operands += [packed["gb"][i], packed["w"][i]]
    operands.append(packed["b"][-1])

    kernel = functools.partial(_fused_forward_kernel, num_layers=num_layers,
                               n_rows=n_rows, mask_rows=(bp != n_rows))
    return pl.pallas_call(
        kernel,
        out_shape=jax.ShapeDtypeStruct((bp, cout_last), jnp.float32),
        grid_spec=pltpu.PrefetchScalarGridSpec(
            num_scalar_prefetch=0,
            grid=(1,),
            in_specs=[pl.BlockSpec(op.shape, lambda i: (0, 0)) for op in operands],
            out_specs=pl.BlockSpec((bp, cout_last), lambda i: (0, 0))),
        compiler_params=pltpu.CompilerParams(
            dimension_semantics=("arbitrary",),
            vmem_limit_bytes=vmem_limit),
    )(*operands)


# ----------------------------------------------------------------------------------
# Tiled path, pass 1 (input only): full-batch BN_0 statistics -> packed (scale, shift)
# ----------------------------------------------------------------------------------
def _bn0_stats_kernel(x_ref, gb_ref, affine_ref, sum_sc, ssq_sc, *, n_rows):
    step = pl.program_id(0)

    @pl.when(step == 0)
    def _init():
        sum_sc[...] = jnp.zeros_like(sum_sc)
        ssq_sc[...] = jnp.zeros_like(ssq_sc)

    x = x_ref[...].astype(jnp.float32)          # padded batch rows are exact zeros
    sum_sc[...] += jnp.sum(x, axis=0, keepdims=True)
    ssq_sc[...] += jnp.sum(x * x, axis=0, keepdims=True)

    @pl.when(step == pl.num_programs(0) - 1)
    def _finalize():
        inv_n = 1.0 / float(n_rows)
        mean = sum_sc[...] * inv_n
        var = jnp.maximum(ssq_sc[...] * inv_n - mean * mean, 0.0)
        gb = gb_ref[...]
        scale = gb[0:1, :] * jax.lax.rsqrt(var + BN_EPS)
        affine_ref[0:1, :] = scale
        affine_ref[1:2, :] = gb[1:2, :] - mean * scale


def _bn0_affine(a, gb, n_rows, batch_tile, vmem_limit):
    bp, cpad = a.shape
    nt = bp // batch_tile
    kernel = functools.partial(_bn0_stats_kernel, n_rows=n_rows)
    return pl.pallas_call(
        kernel,
        out_shape=jax.ShapeDtypeStruct((2, cpad), jnp.float32),
        grid_spec=pltpu.PrefetchScalarGridSpec(
            num_scalar_prefetch=0,
            grid=(nt,),
            in_specs=[_x_spec((batch_tile, cpad), lambda i: (i, 0), nt),
                      pl.BlockSpec((2, cpad), lambda i: (0, 0))],
            out_specs=pl.BlockSpec((2, cpad), lambda i: (0, 0)),
            scratch_shapes=[pltpu.VMEM((1, cpad), jnp.float32),
                            pltpu.VMEM((1, cpad), jnp.float32)]),
        compiler_params=pltpu.CompilerParams(
            dimension_semantics=("arbitrary",),
            vmem_limit_bytes=vmem_limit),
    )(a, gb)


# ----------------------------------------------------------------------------------
# Tiled path, per-layer kernel: fused BN-apply -> (relu) -> matmul -> (+bias/relu),
# with the NEXT layer's BN statistics accumulated in the epilogue so each activation
# slab is read from HBM exactly once per layer (one launch per layer).
# ----------------------------------------------------------------------------------
def _layer_kernel(*refs, relu_in, relu_out, add_bias, emit_affine,
                  n_rows, batch_tile, mask_rows):
    it = iter(refs)
    x_ref = next(it)
    affine_ref = next(it)
    w_ref = next(it)
    b_ref = next(it) if add_bias else None
    gbn_ref = next(it) if emit_affine else None
    y_ref = next(it)
    affine_out_ref = next(it) if emit_affine else None
    sum_sc = next(it) if emit_affine else None
    ssq_sc = next(it) if emit_affine else None

    step = pl.program_id(0)

    if emit_affine:
        @pl.when(step == 0)
        def _init():
            sum_sc[...] = jnp.zeros_like(sum_sc)
            ssq_sc[...] = jnp.zeros_like(ssq_sc)

    aff = affine_ref[...]
    h = x_ref[...].astype(jnp.float32) * aff[0:1, :] + aff[1:2, :]   # folded BN
    if relu_in:
        h = jnp.maximum(h, 0.0)
    w = w_ref[...]
    y = jnp.dot(h.astype(w.dtype), w, preferred_element_type=jnp.float32)
    if add_bias:
        y = y + b_ref[...]
    if relu_out:
        y = jnp.maximum(y, 0.0)

    if emit_affine:
        ys = y
        if mask_rows:
            row = (jax.lax.broadcasted_iota(jnp.int32, y.shape, 0)
                   + step * batch_tile)
            ys = jnp.where(row < n_rows, y, 0.0)   # keep padded rows out of the stats
        sum_sc[...] += jnp.sum(ys, axis=0, keepdims=True)
        ssq_sc[...] += jnp.sum(ys * ys, axis=0, keepdims=True)

    y_ref[...] = y.astype(y_ref.dtype)             # lane-dense (cout padded to 128)

    if emit_affine:
        @pl.when(step == pl.num_programs(0) - 1)
        def _finalize():
            inv_n = 1.0 / float(n_rows)
            mean = sum_sc[...] * inv_n
            var = jnp.maximum(ssq_sc[...] * inv_n - mean * mean, 0.0)
            gb = gbn_ref[...]
            scale = gb[0:1, :] * jax.lax.rsqrt(var + BN_EPS)
            affine_out_ref[0:1, :] = scale
            affine_out_ref[1:2, :] = gb[1:2, :] - mean * scale


def _layer_call(a, affine, w, b, gb_next, *, relu_in, relu_out, batch_tile,
                n_rows, out_dtype, vmem_limit):
    bp, cin = a.shape
    cout = w.shape[1]
    nt = bp // batch_tile
    add_bias = b is not None
    emit_affine = gb_next is not None

    kernel = functools.partial(
        _layer_kernel, relu_in=relu_in, relu_out=relu_out, add_bias=add_bias,
        emit_affine=emit_affine, n_rows=n_rows, batch_tile=batch_tile,
        mask_rows=(bp != n_rows))

    in_specs = [_x_spec((batch_tile, cin), lambda i: (i, 0), nt),    # x: batch-tiled
                pl.BlockSpec((2, cin), lambda i: (0, 0)),            # BN affine resident
                pl.BlockSpec((cin, cout), lambda i: (0, 0))]         # W resident
    operands = [a, affine, w]
    if add_bias:
        in_specs.append(pl.BlockSpec((1, cout), lambda i: (0, 0)))   # bias resident
        operands.append(b)
    if emit_affine:
        in_specs.append(pl.BlockSpec((2, cout), lambda i: (0, 0)))   # next gamma/beta
        operands.append(gb_next)

    if emit_affine:
        out_shape = (jax.ShapeDtypeStruct((bp, cout), out_dtype),
                     jax.ShapeDtypeStruct((2, cout), jnp.float32))
        out_specs = (pl.BlockSpec((batch_tile, cout), lambda i: (i, 0)),
                     pl.BlockSpec((2, cout), lambda i: (0, 0)))
        scratch = [pltpu.VMEM((1, cout), jnp.float32),
                   pltpu.VMEM((1, cout), jnp.float32)]
        semantics = ("arbitrary",)      # batch axis carries the stats reduction
    else:
        out_shape = jax.ShapeDtypeStruct((bp, cout), out_dtype)
        out_specs = pl.BlockSpec((batch_tile, cout), lambda i: (i, 0))
        scratch = []
        semantics = ("parallel",)       # last layer: megacore-shard the batch (v7x)

    cost = pl.CostEstimate(
        flops=2 * bp * cin * cout,
        transcendentals=0,
        bytes_accessed=(a.size * a.dtype.itemsize
                        + w.size * w.dtype.itemsize
                        + bp * cout * np.dtype(out_dtype).itemsize))

    result = pl.pallas_call(
        kernel,
        out_shape=out_shape,
        grid_spec=pltpu.PrefetchScalarGridSpec(
            num_scalar_prefetch=0,
            grid=(nt,),
            in_specs=in_specs,
            out_specs=out_specs,
            scratch_shapes=scratch),
        compiler_params=pltpu.CompilerParams(
            dimension_semantics=semantics,
            vmem_limit_bytes=vmem_limit),
        cost_estimate=cost,
    )(*operands)

    if emit_affine:
        return result[0], result[1]
    return result, None


# ----------------------------------------------------------------------------------
# Full forward pass
# ----------------------------------------------------------------------------------
def feed_forward_net(x, packed, *, force_tiled=False, max_batch_tile=None):
    """FeedForwardNet forward. x: (batch, cfg[0]) f32; packed from pack_params()."""
    cfg = packed["cfg"]
    num_layers = len(cfg) - 1
    batch, in_dim = x.shape
    assert in_dim == cfg[0]

    cfg_p = [_round_up(c, LANE) for c in cfg]
    widest = max(cfg_p)
    vmem_budget = _vmem_budget_bytes()
    w_bytes = [int(w.size) * w.dtype.itemsize for w in packed["w"]]
    bp8 = _round_up(batch, SUBLANE)

    # Small problems: whole network in one resident-activation kernel.
    resident_all = (sum(w_bytes) + sum(int(g.size) * 4 for g in packed["gb"])
                    + int(packed["b"][-1].size) * 4)
    fused_act = 4 * bp8 * widest * 4            # in + out + two live f32 temporaries
    use_fused = (not force_tiled) and \
        (fused_act + resident_all + (2 << 20) <= int(vmem_budget * 0.7))

    if use_fused:
        a = jnp.zeros((bp8, cfg_p[0]), jnp.float32).at[:batch, :in_dim].set(x)
        out = _fused_forward(a, packed, batch, vmem_budget)
        return out[:batch, :cfg[-1]]

    # Tiled path: batch padded to 8 rows and split into near-equal tiles.
    tb, bp, _ = _batch_tiling(batch, widest, vmem_budget, 2 * max(w_bytes),
                              max_batch_tile=max_batch_tile)
    a = jnp.zeros((bp, cfg_p[0]), jnp.float32).at[:batch, :in_dim].set(x)

    act_dtype = packed["act_dtype"]
    affine = _bn0_affine(a, packed["gb"][0], batch, tb, vmem_budget)
    for i in range(num_layers):
        last = (i == num_layers - 1)
        a, affine = _layer_call(
            a, affine, packed["w"][i], packed["b"][i],
            None if last else packed["gb"][i + 1],
            relu_in=(i >= 1),                   # relu follows BN_i for i >= 1
            relu_out=last,                      # final relu after the last Linear
            batch_tile=tb, n_rows=batch,
            out_dtype=jnp.float32 if last else act_dtype,
            vmem_limit=vmem_budget)

    return a[:batch, :cfg[-1]]


# ----------------------------------------------------------------------------------
# Parameter construction (mirrors FeedForwardNet.__init__) and pure-JAX reference
# ----------------------------------------------------------------------------------
def init_raw_params(key, cfg):
    """Unpadded f32 params: xavier-uniform weights, zero biases, BN gamma=1/beta=0."""
    num_layers = len(cfg) - 1
    gammas, betas, ws, bs = [], [], [], []
    for i in range(num_layers):
        gammas.append(jnp.ones((cfg[i],), jnp.float32))     # BN_i over cfg[i] features
        betas.append(jnp.zeros((cfg[i],), jnp.float32))
        fan_in, fan_out = cfg[i], cfg[i + 1]
        key, sub = jax.random.split(key)
        bound = math.sqrt(6.0 / (fan_in + fan_out))          # xavier uniform, gain=1
        ws.append(jax.random.uniform(sub, (fan_in, fan_out), jnp.float32,
                                     -bound, bound))
        bs.append(jnp.zeros((fan_out,), jnp.float32))
    return {"gamma": gammas, "beta": betas, "w": ws, "b": bs}


def pack_params(raw, cfg, matmul_dtype=jnp.bfloat16):
    """Pad/pack params once: features -> multiples of 128 lanes, gamma/beta packed
    into one (2, C) slab per BN (padded gamma left at 0 so padded lanes stay exactly
    zero), weights stored in the matmul dtype.  Hidden-layer Linear biases are
    dropped: a per-feature constant added right before a BatchNorm cancels exactly
    in (x - mean)."""
    num_layers = len(cfg) - 1
    gb_list, w_list, b_list = [], [], []
    for i in range(num_layers):
        cin, cout = cfg[i], cfg[i + 1]
        cin_p, cout_p = _round_up(cin, LANE), _round_up(cout, LANE)

        gb = jnp.zeros((2, cin_p), jnp.float32)
        gb = gb.at[0, :cin].set(raw["gamma"][i]).at[1, :cin].set(raw["beta"][i])
        gb_list.append(gb)

        w = jnp.zeros((cin_p, cout_p), jnp.float32).at[:cin, :cout].set(raw["w"][i])
        w_list.append(w.astype(matmul_dtype))

        if i == num_layers - 1:
            b_list.append(jnp.zeros((1, cout_p), jnp.float32)
                          .at[0, :cout].set(raw["b"][i]))
        else:
            b_list.append(None)    # bias before a BatchNorm cancels algebraically
    return {"cfg": tuple(cfg), "gb": gb_list, "w": w_list, "b": b_list,
            "act_dtype": matmul_dtype}


def reference_forward(x, raw):
    """Faithful pure-JAX (f32) reference of the PyTorch forward."""
    num_layers = len(raw["w"])

    def bn(v, g, b):
        mean = jnp.mean(v, axis=0, keepdims=True)
        var = jnp.mean((v - mean) ** 2, axis=0, keepdims=True)
        return (v - mean) * jax.lax.rsqrt(var + BN_EPS) * g + b

    h = bn(x, raw["gamma"][0], raw["beta"][0])
    for i in range(num_layers - 1):
        h = h @ raw["w"][i] + raw["b"][i]
        h = bn(h, raw["gamma"][i + 1], raw["beta"][i + 1])
        h = jnp.maximum(h, 0.0)          # dropout(p=0) == identity
    h = h @ raw["w"][num_layers - 1] + raw["b"][num_layers - 1]
    return jnp.maximum(h, 0.0)


if __name__ == "__main__":
    key = jax.random.PRNGKey(0)

    # --- Small net: fully-resident single-kernel path ---
    cfg = [16, 32, 32, 8]            # cfg[0] = input dim, cfg[-1] = output dim
    batch = 8
    key, xk, pk = jax.random.split(key, 3)
    x = jax.random.normal(xk, (batch, cfg[0]), jnp.float32)
    raw = init_raw_params(pk, cfg)
    ref = reference_forward(x, raw)

    out_f32 = jax.block_until_ready(
        feed_forward_net(x, pack_params(raw, cfg, matmul_dtype=jnp.float32)))
    assert out_f32.shape == (batch, cfg[-1])
    assert jnp.allclose(out_f32, ref, atol=1e-4, rtol=1e-4)

    out_bf16 = jax.block_until_ready(
        feed_forward_net(x, pack_params(raw, cfg, matmul_dtype=jnp.bfloat16)))
    assert out_bf16.shape == (batch, cfg[-1])
    assert jnp.allclose(out_bf16, ref, atol=5e-2, rtol=5e-2)

    # --- Tiled multi-pass path: fused BN-stats epilogue, uneven batch, row masking ---
    cfg2 = [24, 64, 48, 10]
    batch2 = 300                     # not a tile multiple -> exercises padding/masking
    key, xk2, pk2 = jax.random.split(key, 3)
    x2 = jax.random.normal(xk2, (batch2, cfg2[0]), jnp.float32)
    raw2 = init_raw_params(pk2, cfg2)
    ref2 = reference_forward(x2, raw2)

    out2 = jax.block_until_ready(
        feed_forward_net(x2, pack_params(raw2, cfg2, matmul_dtype=jnp.float32),
                         force_tiled=True, max_batch_tile=64))
    assert out2.shape == (batch2, cfg2[-1])
    assert jnp.allclose(out2, ref2, atol=1e-3, rtol=1e-3)

    print("KERNEL_OK")
</pallas_src>

<mosaic_0001>
module attributes {stable_mosaic.version = 11 : i64} {
  func.func @_fused_forward_kernel(%arg0: i32, %arg1: memref<8x128xf32, #tpu.memory_space<vmem>>, %arg2: memref<2x128xf32, #tpu.memory_space<vmem>>, %arg3: memref<128x128xf32, #tpu.memory_space<vmem>>, %arg4: memref<2x128xf32, #tpu.memory_space<vmem>>, %arg5: memref<128x128xf32, #tpu.memory_space<vmem>>, %arg6: memref<2x128xf32, #tpu.memory_space<vmem>>, %arg7: memref<128x128xf32, #tpu.memory_space<vmem>>, %arg8: memref<1x128xf32, #tpu.memory_space<vmem>>, %arg9: memref<8x128xf32, #tpu.memory_space<vmem>>) attributes {dimension_semantics = [#tpu.dimension_semantics<arbitrary>], iteration_bounds = array<i64: 1>, scalar_prefetch = 0 : i64, scratch_operands = 0 : i64, tpu.core_type = #tpu.core_type<tc>, window_params = [{pipeline_mode = #tpu.pipeline_mode<synchronous>, transform_indices = @transform_0, window_bounds = array<i64: 8, 128>}, {pipeline_mode = #tpu.pipeline_mode<synchronous>, transform_indices = @transform_1, window_bounds = array<i64: 2, 128>}, {pipeline_mode = #tpu.pipeline_mode<synchronous>, transform_indices = @transform_2, window_bounds = array<i64: 128, 128>}, {pipeline_mode = #tpu.pipeline_mode<synchronous>, transform_indices = @transform_3, window_bounds = array<i64: 2, 128>}, {pipeline_mode = #tpu.pipeline_mode<synchronous>, transform_indices = @transform_4, window_bounds = array<i64: 128, 128>}, {pipeline_mode = #tpu.pipeline_mode<synchronous>, transform_indices = @transform_5, window_bounds = array<i64: 2, 128>}, {pipeline_mode = #tpu.pipeline_mode<synchronous>, transform_indices = @transform_6, window_bounds = array<i64: 128, 128>}, {pipeline_mode = #tpu.pipeline_mode<synchronous>, transform_indices = @transform_7, window_bounds = array<i64: 1, 128>}, {pipeline_mode = #tpu.pipeline_mode<synchronous>, transform_indices = @transform_8, window_bounds = array<i64: 8, 128>}]} {
    %c0 = arith.constant 0 : index
    %c0_0 = arith.constant 0 : index
    %0 = vector.load %arg1[%c0, %c0_0] : memref<8x128xf32, #tpu.memory_space<vmem>>, vector<8x128xf32>
    %c0_1 = arith.constant 0 : index
    %c0_2 = arith.constant 0 : index
    %1 = vector.load %arg2[%c0_1, %c0_2] : memref<2x128xf32, #tpu.memory_space<vmem>>, vector<2x128xf32>
    %c0_3 = arith.constant 0 : index
    %c0_4 = arith.constant 0 : index
    %2 = vector.load %arg3[%c0_3, %c0_4] : memref<128x128xf32, #tpu.memory_space<vmem>>, vector<128x128xf32>
    %cst = arith.constant dense<0.000000e+00> : vector<128xf32>
    %3 = vector.multi_reduction <add>, %0, %cst [0] : vector<8x128xf32> to vector<128xf32>
    %4 = vector.shape_cast %3 : vector<128xf32> to vector<1x128xf32>
    %cst_5 = arith.constant 1.250000e-01 : f32
    %5 = vector.broadcast %cst_5 : f32 to vector<1x128xf32>
    %6 = arith.mulf %4, %5 : vector<1x128xf32>
    %7 = arith.mulf %0, %0 : vector<8x128xf32>
    %cst_6 = arith.constant dense<0.000000e+00> : vector<128xf32>
    %8 = vector.multi_reduction <add>, %7, %cst_6 [0] : vector<8x128xf32> to vector<128xf32>
    %9 = vector.shape_cast %8 : vector<128xf32> to vector<1x128xf32>
    %cst_7 = arith.constant 1.250000e-01 : f32
    %10 = vector.broadcast %cst_7 : f32 to vector<1x128xf32>
    %11 = arith.mulf %9, %10 : vector<1x128xf32>
    %12 = arith.mulf %6, %6 : vector<1x128xf32>
    %13 = arith.subf %11, %12 : vector<1x128xf32>
    %cst_8 = arith.constant 0.000000e+00 : f32
    %14 = vector.broadcast %cst_8 : f32 to vector<1x128xf32>
    %15 = arith.maximumf %13, %14 : vector<1x128xf32>
    %16 = vector.extract_strided_slice %1 {offsets = [0, 0], sizes = [1, 128], strides = [1, 1]} : vector<2x128xf32> to vector<1x128xf32>
    %cst_9 = arith.constant 9.99999974E-6 : f32
    %17 = vector.broadcast %cst_9 : f32 to vector<1x128xf32>
    %18 = arith.addf %15, %17 : vector<1x128xf32>
    %19 = math.rsqrt %18 : vector<1x128xf32>
    %20 = arith.mulf %16, %19 : vector<1x128xf32>
    %21 = vector.extract_strided_slice %1 {offsets = [1, 0], sizes = [1, 128], strides = [1, 1]} : vector<2x128xf32> to vector<1x128xf32>
    %22 = arith.mulf %6, %20 : vector<1x128xf32>
    %23 = arith.subf %21, %22 : vector<1x128xf32>
    %24 = vector.broadcast %20 : vector<1x128xf32> to vector<8x128xf32>
    %25 = arith.mulf %0, %24 : vector<8x128xf32>
    %26 = vector.broadcast %23 : vector<1x128xf32> to vector<8x128xf32>
    %27 = arith.addf %25, %26 : vector<8x128xf32>
    %cst_10 = arith.constant dense<0.000000e+00> : vector<8x128xf32>
    %28 = tpu.matmul %27, %2, %cst_10 {dimension_numbers = #tpu.dot_dimension_numbers<[1], [0], [0], [1], [0, 0, 1, 1], [], []>} : vector<8x128xf32>, vector<128x128xf32>, vector<8x128xf32> -> vector<8x128xf32>
    %c0_11 = arith.constant 0 : index
    %c0_12 = arith.constant 0 : index
    %29 = vector.load %arg4[%c0_11, %c0_12] : memref<2x128xf32, #tpu.memory_space<vmem>>, vector<2x128xf32>
    %c0_13 = arith.constant 0 : index
    %c0_14 = arith.constant 0 : index
    %30 = vector.load %arg5[%c0_13, %c0_14] : memref<128x128xf32, #tpu.memory_space<vmem>>, vector<128x128xf32>
    %cst_15 = arith.constant dense<0.000000e+00> : vector<128xf32>
    %31 = vector.multi_reduction <add>, %28, %cst_15 [0] : vector<8x128xf32> to vector<128xf32>
    %32 = vector.shape_cast %31 : vector<128xf32> to vector<1x128xf32>
    %cst_16 = arith.constant 1.250000e-01 : f32
    %33 = vector.broadcast %cst_16 : f32 to vector<1x128xf32>
    %34 = arith.mulf %32, %33 : vector<1x128xf32>
    %35 = arith.mulf %28, %28 : vector<8x128xf32>
    %cst_17 = arith.constant dense<0.000000e+00> : vector<128xf32>
    %36 = vector.multi_reduction <add>, %35, %cst_17 [0] : vector<8x128xf32> to vector<128xf32>
    %37 = vector.shape_cast %36 : vector<128xf32> to vector<1x128xf32>
    %cst_18 = arith.constant 1.250000e-01 : f32
    %38 = vector.broadcast %cst_18 : f32 to vector<1x128xf32>
    %39 = arith.mulf %37, %38 : vector<1x128xf32>
    %40 = arith.mulf %34, %34 : vector<1x128xf32>
    %41 = arith.subf %39, %40 : vector<1x128xf32>
    %cst_19 = arith.constant 0.000000e+00 : f32
    %42 = vector.broadcast %cst_19 : f32 to vector<1x128xf32>
    %43 = arith.maximumf %41, %42 : vector<1x128xf32>
    %44 = vector.extract_strided_slice %29 {offsets = [0, 0], sizes = [1, 128], strides = [1, 1]} : vector<2x128xf32> to vector<1x128xf32>
    %cst_20 = arith.constant 9.99999974E-6 : f32
    %45 = vector.broadcast %cst_20 : f32 to vector<1x128xf32>
    %46 = arith.addf %43, %45 : vector<1x128xf32>
    %47 = math.rsqrt %46 : vector<1x128xf32>
    %48 = arith.mulf %44, %47 : vector<1x128xf32>
    %49 = vector.extract_strided_slice %29 {offsets = [1, 0], sizes = [1, 128], strides = [1, 1]} : vector<2x128xf32> to vector<1x128xf32>
    %50 = arith.mulf %34, %48 : vector<1x128xf32>
    %51 = arith.subf %49, %50 : vector<1x128xf32>
    %52 = vector.broadcast %48 : vector<1x128xf32> to vector<8x128xf32>
    %53 = arith.mulf %28, %52 : vector<8x128xf32>
    %54 = vector.broadcast %51 : vector<1x128xf32> to vector<8x128xf32>
    %55 = arith.addf %53, %54 : vector<8x128xf32>
    %cst_21 = arith.constant 0.000000e+00 : f32
    %56 = vector.broadcast %cst_21 : f32 to vector<8x128xf32>
    %57 = arith.maximumf %55, %56 : vector<8x128xf32>
    %cst_22 = arith.constant dense<0.000000e+00> : vector<8x128xf32>
    %58 = tpu.matmul %57, %30, %cst_22 {dimension_numbers = #tpu.dot_dimension_numbers<[1], [0], [0], [1], [0, 0, 1, 1], [], []>} : vector<8x128xf32>, vector<128x128xf32>, vector<8x128xf32> -> vector<8x128xf32>
    %c0_23 = arith.constant 0 : index
    %c0_24 = arith.constant 0 : index
    %59 = vector.load %arg6[%c0_23, %c0_24] : memref<2x128xf32, #tpu.memory_space<vmem>>, vector<2x128xf32>
    %c0_25 = arith.constant 0 : index
    %c0_26 = arith.constant 0 : index
    %60 = vector.load %arg7[%c0_25, %c0_26] : memref<128x128xf32, #tpu.memory_space<vmem>>, vector<128x128xf32>
    %cst_27 = arith.constant dense<0.000000e+00> : vector<128xf32>
    %61 = vector.multi_reduction <add>, %58, %cst_27 [0] : vector<8x128xf32> to vector<128xf32>
    %62 = vector.shape_cast %61 : vector<128xf32> to vector<1x128xf32>
    %cst_28 = arith.constant 1.250000e-01 : f32
    %63 = vector.broadcast %cst_28 : f32 to vector<1x128xf32>
    %64 = arith.mulf %62, %63 : vector<1x128xf32>
    %65 = arith.mulf %58, %58 : vector<8x128xf32>
    %cst_29 = arith.constant dense<0.000000e+00> : vector<128xf32>
    %66 = vector.multi_reduction <add>, %65, %cst_29 [0] : vector<8x128xf32> to vector<128xf32>
    %67 = vector.shape_cast %66 : vector<128xf32> to vector<1x128xf32>
    %cst_30 = arith.constant 1.250000e-01 : f32
    %68 = vector.broadcast %cst_30 : f32 to vector<1x128xf32>
    %69 = arith.mulf %67, %68 : vector<1x128xf32>
    %70 = arith.mulf %64, %64 : vector<1x128xf32>
    %71 = arith.subf %69, %70 : vector<1x128xf32>
    %cst_31 = arith.constant 0.000000e+00 : f32
    %72 = vector.broadcast %cst_31 : f32 to vector<1x128xf32>
    %73 = arith.maximumf %71, %72 : vector<1x128xf32>
    %74 = vector.extract_strided_slice %59 {offsets = [0, 0], sizes = [1, 128], strides = [1, 1]} : vector<2x128xf32> to vector<1x128xf32>
    %cst_32 = arith.constant 9.99999974E-6 : f32
    %75 = vector.broadcast %cst_32 : f32 to vector<1x128xf32>
    %76 = arith.addf %73, %75 : vector<1x128xf32>
    %77 = math.rsqrt %76 : vector<1x128xf32>
    %78 = arith.mulf %74, %77 : vector<1x128xf32>
    %79 = vector.extract_strided_slice %59 {offsets = [1, 0], sizes = [1, 128], strides = [1, 1]} : vector<2x128xf32> to vector<1x128xf32>
    %80 = arith.mulf %64, %78 : vector<1x128xf32>
    %81 = arith.subf %79, %80 : vector<1x128xf32>
    %82 = vector.broadcast %78 : vector<1x128xf32> to vector<8x128xf32>
    %83 = arith.mulf %58, %82 : vector<8x128xf32>
    %84 = vector.broadcast %81 : vector<1x128xf32> to vector<8x128xf32>
    %85 = arith.addf %83, %84 : vector<8x128xf32>
    %cst_33 = arith.constant 0.000000e+00 : f32
    %86 = vector.broadcast %cst_33 : f32 to vector<8x128xf32>
    %87 = arith.maximumf %85, %86 : vector<8x128xf32>
    %cst_34 = arith.constant dense<0.000000e+00> : vector<8x128xf32>
    %88 = tpu.matmul %87, %60, %cst_34 {dimension_numbers = #tpu.dot_dimension_numbers<[1], [0], [0], [1], [0, 0, 1, 1], [], []>} : vector<8x128xf32>, vector<128x128xf32>, vector<8x128xf32> -> vector<8x128xf32>
    %c0_35 = arith.constant 0 : index
    %c0_36 = arith.constant 0 : index
    %89 = vector.load %arg8[%c0_35, %c0_36] : memref<1x128xf32, #tpu.memory_space<vmem>>, vector<1x128xf32>
    %90 = vector.broadcast %89 : vector<1x128xf32> to vector<8x128xf32>
    %91 = arith.addf %88, %90 : vector<8x128xf32>
    %cst_37 = arith.constant 0.000000e+00 : f32
    %92 = vector.broadcast %cst_37 : f32 to vector<8x128xf32>
    %93 = arith.maximumf %91, %92 : vector<8x128xf32>
    %c0_38 = arith.constant 0 : index
    %c0_39 = arith.constant 0 : index
    %94 = vector.load %arg9[%c0_38, %c0_39] : memref<8x128xf32, #tpu.memory_space<vmem>>, vector<8x128xf32>
    tpu.vector_store %arg9[%c0_38, %c0_39], %93 {strides = array<i32>} : memref<8x128xf32, #tpu.memory_space<vmem>>, vector<8x128xf32>,
    return
  }
  func.func @transform_0(%arg0: i32) -> (i32, i32) {
    %c0_i32 = arith.constant 0 : i32
    %c0_i32_0 = arith.constant 0 : i32
    %c0_i32_1 = arith.constant 0 : i32
    return %c0_i32, %c0_i32_0 : i32, i32
  }
  func.func @transform_1(%arg0: i32) -> (i32, i32) {
    %c0_i32 = arith.constant 0 : i32
    %c0_i32_0 = arith.constant 0 : i32
    %c0_i32_1 = arith.constant 0 : i32
    return %c0_i32, %c0_i32_0 : i32, i32
  }
  func.func @transform_2(%arg0: i32) -> (i32, i32) {
    %c0_i32 = arith.constant 0 : i32
    %c0_i32_0 = arith.constant 0 : i32
    %c0_i32_1 = arith.constant 0 : i32
    return %c0_i32, %c0_i32_0 : i32, i32
  }
  func.func @transform_3(%arg0: i32) -> (i32, i32) {
    %c0_i32 = arith.constant 0 : i32
    %c0_i32_0 = arith.constant 0 : i32
    %c0_i32_1 = arith.constant 0 : i32
    return %c0_i32, %c0_i32_0 : i32, i32
  }
  func.func @transform_4(%arg0: i32) -> (i32, i32) {
    %c0_i32 = arith.constant 0 : i32
    %c0_i32_0 = arith.constant 0 : i32
    %c0_i32_1 = arith.constant 0 : i32
    return %c0_i32, %c0_i32_0 : i32, i32
  }
  func.func @transform_5(%arg0: i32) -> (i32, i32) {
    %c0_i32 = arith.constant 0 : i32
    %c0_i32_0 = arith.constant 0 : i32
    %c0_i32_1 = arith.constant 0 : i32
    return %c0_i32, %c0_i32_0 : i32, i32
  }
  func.func @transform_6(%arg0: i32) -> (i32, i32) {
    %c0_i32 = arith.constant 0 : i32
    %c0_i32_0 = arith.constant 0 : i32
    %c0_i32_1 = arith.constant 0 : i32
    return %c0_i32, %c0_i32_0 : i32, i32
  }
  func.func @transform_7(%arg0: i32) -> (i32, i32) {
    %c0_i32 = arith.constant 0 : i32
    %c0_i32_0 = arith.constant 0 : i32
    %c0_i32_1 = arith.constant 0 : i32
    return %c0_i32, %c0_i32_0 : i32, i32
  }
  func.func @transform_8(%arg0: i32) -> (i32, i32) {
    %c0_i32 = arith.constant 0 : i32
    %c0_i32_0 = arith.constant 0 : i32
    %c0_i32_1 = arith.constant 0 : i32
    return %c0_i32, %c0_i32_0 : i32, i32
  }
}

</mosaic_0001>

<llo_original>
// kernel: tpu_custom_call.1
$region0: #{tpu_custom_call.1}
  #allocation0 [shape = 'u32[]', space=smem, size = 0x4, offset = 0x4, fixed_abs, tag = 'smem constant byte address 0x4 - core index']
  #allocation1 [shape = 'u32[144,128]{1,0:T(1,128)}', space=vmem, size = 0x12000, scoped, tag = 'internal scratch']
  %s0 = inlined_call_operand.hbm [shape: f32[8,128], index: 0, kind: input, shape index: {}]
  %s1 = inlined_call_operand.vmem [shape: f32[2,128], index: 1, kind: input, shape index: {}]
  %s2 = inlined_call_operand.hbm [shape: f32[128,128], index: 2, kind: input, shape index: {}]
  %s3 = inlined_call_operand.vmem [shape: f32[2,128], index: 3, kind: input, shape index: {}]
  %s4 = inlined_call_operand.hbm [shape: f32[128,128], index: 4, kind: input, shape index: {}]
  %s5 = inlined_call_operand.vmem [shape: f32[2,128], index: 5, kind: input, shape index: {}]
  %s6 = inlined_call_operand.hbm [shape: f32[128,128], index: 6, kind: input, shape index: {}]
  %s7 = inlined_call_operand.vmem [shape: f32[1,128], index: 7, kind: input, shape index: {}]
  %s8 = inlined_call_operand.hbm [shape: f32[8,128], index: 8, kind: output, shape index: {}]
  %s9 = sld [smem:[#allocation0]]
  $region58: #{tpu_custom_call.1} parent=0
    _
  %s11 = ssub.s32 1, %s9
  %s12 = scalar_select 0, %s11, %s9
  $region1: #{tpu_custom_call.1} parent=0
    #allocation2 [shape = 'u8[4096]{0}', space=vmem, size = 0x1000, scoped, tag = 'input window, operand 0, single buffered']
    #allocation3 [shape = 's32[1]{0}', space=sflag, size = 0x4, scoped, tag = 'scoped memory for tpu_custom_call.1']
    #allocation4 [shape = 's32[1]{0}', space=sflag, size = 0x4, scoped, tag = 'scoped memory for tpu_custom_call.1']
    #allocation5 [shape = 'u8[65536]{0}', space=vmem, size = 0x10000, scoped, tag = 'input window, operand 2, single buffered']
    #allocation6 [shape = 's32[1]{0}', space=sflag, size = 0x4, scoped, tag = 'scoped memory for tpu_custom_call.1']
    #allocation7 [shape = 'u8[65536]{0}', space=vmem, size = 0x10000, scoped, tag = 'input window, operand 4, single buffered']
    #allocation8 [shape = 'u8[65536]{0}', space=vmem, size = 0x10000, scoped, tag = 'input window, operand 6, single buffered']
    #allocation9 [shape = 's32[1]{0}', space=sflag, size = 0x4, scoped, tag = 'scoped memory for tpu_custom_call.1']
    #allocation10 [shape = 'u8[4096]{0}', space=vmem, size = 0x1000, scoped, tag = 'output window, operand 0, single buffered']
    %13 = vsyncpa [#allocation3], 0
    %14 = vsyncpa [#allocation6], 0
    %15 = vsyncpa [#allocation9], 0
    %16 = vsyncpa [#allocation4], 0
    // Predicated region
    $region2: #{tpu_custom_call.1} parent=1 // pred_check
      _
    $region3: #{tpu_custom_call.1} parent=1 // pred_check_branch
      %18 = sbr.rel (0) target = $region5
    $region4: #{tpu_custom_call.1} parent=1 // pred_region
      %s20 = ssub.s32 128, 128
      %21 = vsyncadd [#allocation3], %s20
      %s23 = sshll.u32 [#allocation2], 4
      %s24 = int_to_ptr.vmem [resolvable:$true] %s23
      %26 = dma.hbm_to_vmem [thread:$0]  %s0, 128, %s24, [#allocation3]
    $region5: #{tpu_custom_call.1} parent=1 // pred_fallthru
      _
    // Predicated region
    $region6: #{tpu_custom_call.1} parent=1 // pred_check
      _
    $region7: #{tpu_custom_call.1} parent=1 // pred_check_branch
      %28 = sbr.rel (0) target = $region9
    $region8: #{tpu_custom_call.1} parent=1 // pred_region
      _
    $region9: #{tpu_custom_call.1} parent=1 // pred_fallthru
      _
    // Predicated region
    $region10: #{tpu_custom_call.1} parent=1 // pred_check
      _
    $region11: #{tpu_custom_call.1} parent=1 // pred_check_branch
      %30 = sbr.rel (0) target = $region13
    $region12: #{tpu_custom_call.1} parent=1 // pred_region
      %s32 = ssub.s32 2048, 2048
      %33 = vsyncadd [#allocation6], %s32
      %s34 = sshll.u32 [#allocation5], 4
      %s35 = int_to_ptr.vmem [resolvable:$true] %s34
      %40 = dma.hbm_to_vmem [thread:$0]  %s2, 2048, %s35, [#allocation6], 128, 128, 8
    $region13: #{tpu_custom_call.1} parent=1 // pred_fallthru
      _
    // Predicated region
    $region14: #{tpu_custom_call.1} parent=1 // pred_check
      _
    $region15: #{tpu_custom_call.1} parent=1 // pred_check_branch
      %42 = sbr.rel (0) target = $region17
    $region16: #{tpu_custom_call.1} parent=1 // pred_region
      _
    $region17: #{tpu_custom_call.1} parent=1 // pred_fallthru
      _
    // Predicated region
    $region18: #{tpu_custom_call.1} parent=1 // pred_check
      _
    $region19: #{tpu_custom_call.1} parent=1 // pred_check_branch
      %44 = sbr.rel (0) target = $region21
    $region20: #{tpu_custom_call.1} parent=1 // pred_region
      %s46 = ssub.s32 2048, 2048
      %47 = vsyncadd [#allocation6], %s46
      %s48 = sshll.u32 [#allocation7], 4
      %s49 = int_to_ptr.vmem [resolvable:$true] %s48
      %54 = dma.hbm_to_vmem [thread:$0]  %s4, 2048, %s49, [#allocation6], 128, 128, 8
    $region21: #{tpu_custom_call.1} parent=1 // pred_fallthru
      _
    // Predicated region
    $region22: #{tpu_custom_call.1} parent=1 // pred_check
      _
    $region23: #{tpu_custom_call.1} parent=1 // pred_check_branch
      %56 = sbr.rel (0) target = $region25
    $region24: #{tpu_custom_call.1} parent=1 // pred_region
      _
    $region25: #{tpu_custom_call.1} parent=1 // pred_fallthru
      _
    // Predicated region
    $region26: #{tpu_custom_call.1} parent=1 // pred_check
      _
    $region27: #{tpu_custom_call.1} parent=1 // pred_check_branch
      %58 = sbr.rel (0) target = $region29
    $region28: #{tpu_custom_call.1} parent=1 // pred_region
      %s60 = ssub.s32 2048, 2048
      %61 = vsyncadd [#allocation9], %s60
      %s62 = sshll.u32 [#allocation8], 4
      %s63 = int_to_ptr.vmem [resolvable:$true] %s62
      %68 = dma.hbm_to_vmem [thread:$0]  %s6, 2048, %s63, [#allocation9], 128, 128, 8
    $region29: #{tpu_custom_call.1} parent=1 // pred_fallthru
      _
    // Predicated region
    $region30: #{tpu_custom_call.1} parent=1 // pred_check
      _
    $region31: #{tpu_custom_call.1} parent=1 // pred_check_branch
      %70 = sbr.rel (0) target = $region33
    $region32: #{tpu_custom_call.1} parent=1 // pred_region
      _
    $region33: #{tpu_custom_call.1} parent=1 // pred_fallthru
      _
    // Predicated region
    $region34: #{tpu_custom_call.1} parent=1 // pred_check
      _
    $region35: #{tpu_custom_call.1} parent=1 // pred_check_branch
      %72 = sbr.rel (0) target = $region37
    $region36: #{tpu_custom_call.1} parent=1 // pred_region
      %73 = dma.done [#allocation3], 128
    $region37: #{tpu_custom_call.1} parent=1 // pred_fallthru
      _
    // Predicated region
    $region38: #{tpu_custom_call.1} parent=1 // pred_check
      _
    $region39: #{tpu_custom_call.1} parent=1 // pred_check_branch
      %75 = sbr.rel (0) target = $region41
    $region40: #{tpu_custom_call.1} parent=1 // pred_region
      %76 = dma.done [#allocation6], 2048
    $region41: #{tpu_custom_call.1} parent=1 // pred_fallthru
      _
    // Predicated region
    $region42: #{tpu_custom_call.1} parent=1 // pred_check
      _
    $region43: #{tpu_custom_call.1} parent=1 // pred_check_branch
      %78 = sbr.rel (0) target = $region45
    $region44: #{tpu_custom_call.1} parent=1 // pred_region
      %79 = dma.done [#allocation6], 2048
    $region45: #{tpu_custom_call.1} parent=1 // pred_fallthru
      _
    // Predicated region
    $region46: #{tpu_custom_call.1} parent=1 // pred_check
      _
    $region47: #{tpu_custom_call.1} parent=1 // pred_check_branch
      %81 = sbr.rel (0) target = $region49
    $region48: #{tpu_custom_call.1} parent=1 // pred_region
      %82 = dma.done [#allocation9], 2048
    $region49: #{tpu_custom_call.1} parent=1 // pred_fallthru
      _
    %v83 = vld [vmem:[#allocation2] sm:$0xff]
    %v84 = vld [vmem:[%s1] sm:$0x3]
    %v85 = vld [vmem:[#allocation5] sm:$0xff]
    %v86 = vld [vmem:[#allocation5 + $0x8] sm:$0xff]
    %v87 = vld [vmem:[#allocation5 + $0x10] sm:$0xff]
    %v88 = vld [vmem:[#allocation5 + $0x18] sm:$0xff]
    %v89 = vld [vmem:[#allocation5 + $0x20] sm:$0xff]
    %v90 = vld [vmem:[#allocation5 + $0x28] sm:$0xff]
    %v91 = vld [vmem:[#allocation5 + $0x30] sm:$0xff]
    %v92 = vld [vmem:[#allocation5 + $0x38] sm:$0xff]
    %v93 = vld [vmem:[#allocation5 + $0x40] sm:$0xff]
    %v94 = vld [vmem:[#allocation5 + $0x48] sm:$0xff]
    %v95 = vld [vmem:[#allocation5 + $0x50] sm:$0xff]
    %v96 = vld [vmem:[#allocation5 + $0x58] sm:$0xff]
    %v97 = vld [vmem:[#allocation5 + $0x60] sm:$0xff]
    %v98 = vld [vmem:[#allocation5 + $0x68] sm:$0xff]
    %v99 = vld [vmem:[#allocation5 + $0x70] sm:$0xff]
    %v100 = vld [vmem:[#allocation5 + $0x78] sm:$0xff]
    %v101 = vrot.slane %v83, 4
    %v102 = vadd.f32 %v83, %v101
    %v103 = vrot.slane %v102, 2
    %v104 = vadd.f32 %v102, %v103
    %v105 = vrot.slane %v104, 1
    %v106 = vadd.f32 %v104, %v105
    %v107 = vmul.f32 %v106, 0.125
    %v108 = vmul.f32 %v83, %v83
    %v109 = vrot.slane %v108, 4
    %v110 = vadd.f32 %v108, %v109
    %v111 = vrot.slane %v110, 2
    %v112 = vadd.f32 %v110, %v111
    %v113 = vrot.slane %v112, 1
    %v114 = vadd.f32 %v112, %v113
    %v115 = vmul.f32 %v114, 0.125
    %v116 = vmul.f32 %v107, %v107
    %v117 = vsub.f32 %v115, %v116
    %v118 = vmax.f32 %v117, 0.0
    %v119 = vadd.f32 %v118, 1e-05
    %v120 = vrsqrt.pop %v119
    %v121 = vmul.f32 %v84, %v120
    %v122 = vmul.f32 %v107, %v121
    %v124 = vrot.slane %v122, 7
    %v126 = vsub.f32 %v84, %v124
    %v127 = vlaneseq
    %v128 = vshrl.u32 %v127, 7
    %v129 = vsub.s32 0, %v128
    %v130 = vrot.slane %v121, %v129
    %v131 = vmul.f32 %v83, %v130
    %v132 = vlaneseq
    %v133 = vshrl.u32 %v132, 7
    %v134 = vsub.s32 1, %v133
    %v135 = vrot.slane %v126, %v134
    %v136 = vadd.f32 %v131, %v135
    %137 = vmatprep.subr.mxu0 0.0
    %138 = vmatpush1.msra.mxu0 %v85
    %139 = vmatprep.subr.mxu0 0.0
    %140 = vmatpush1.msra.mxu0 %v86
    %141 = vmatprep.subr.mxu0 0.0
    %142 = vmatpush1.msra.mxu0 %v87
    %143 = vmatprep.subr.mxu0 0.0
    %144 = vmatpush1.msra.mxu0 %v88
    %145 = vmatprep.subr.mxu0 0.0
    %146 = vmatpush1.msra.mxu0 %v89
    %147 = vmatprep.subr.mxu0 0.0
    %148 = vmatpush1.msra.mxu0 %v90
    %149 = vmatprep.subr.mxu0 0.0
    %150 = vmatpush1.msra.mxu0 %v91
    %151 = vmatprep.subr.mxu0 0.0
    %152 = vmatpush1.msra.mxu0 %v92
    %153 = vmatprep.subr.mxu0 0.0
    %154 = vmatpush1.msra.mxu0 %v93
    %155 = vmatprep.subr.mxu0 0.0
    %156 = vmatpush1.msra.mxu0 %v94
    %157 = vmatprep.subr.mxu0 0.0
    %158 = vmatpush1.msra.mxu0 %v95
    %159 = vmatprep.subr.mxu0 0.0
    %160 = vmatpush1.msra.mxu0 %v96
    %161 = vmatprep.subr.mxu0 0.0
    %162 = vmatpush1.msra.mxu0 %v97
    %163 = vmatprep.subr.mxu0 0.0
    %164 = vmatpush1.msra.mxu0 %v98
    %165 = vmatprep.subr.mxu0 0.0
    %166 = vmatpush1.msra.mxu0 %v99
    %167 = vmatprep.subr.mxu0 0.0
    %168 = vmatpush1.msra.mxu0 %v100
    %169 = vmatprep.subr.mxu0 0.0
    %170 = vmatpush1.msra.mxu0 0.0
    %171 = vmatprep.subr.mxu0 0.0
    %172 = vmatpush1.msra.mxu0 0.0
    %173 = vmatprep.subr.mxu0 0.0
    %174 = vmatpush1.msra.mxu0 0.0
    %175 = vmatprep.subr.mxu0 0.0
    %176 = vmatpush1.msra.mxu0 0.0
    %177 = vmatprep.subr.mxu0 0.0
    %178 = vmatpush1.msra.mxu0 0.0
    %179 = vmatprep.subr.mxu0 0.0
    %180 = vmatpush1.msra.mxu0 0.0
    %181 = vmatprep.subr.mxu0 0.0
    %182 = vmatpush1.msra.mxu0 0.0
    %183 = vmatprep.subr.mxu0 0.0
    %184 = vmatpush1.msra.mxu0 0.0
    %185 = vmatprep.subr.mxu0 0.0
    %186 = vmatpush1.msra.mxu0 0.0
    %187 = vmatprep.subr.mxu0 0.0
    %188 = vmatpush1.msra.mxu0 0.0
    %189 = vmatprep.subr.mxu0 0.0
    %190 = vmatpush1.msra.mxu0 0.0
    %191 = vmatprep.subr.mxu0 0.0
    %192 = vmatpush1.msra.mxu0 0.0
    %193 = vmatprep.subr.mxu0 0.0
    %194 = vmatpush1.msra.mxu0 0.0
    %195 = vmatprep.subr.mxu0 0.0
    %196 = vmatpush1.msra.mxu0 0.0
    %197 = vmatprep.subr.mxu0 0.0
    %198 = vmatpush1.msra.mxu0 0.0
    %199 = vmatprep.subr.mxu0 0.0
    %200 = vmatpush1.msra.mxu0 0.0
    %201 = vmatprep.mubr.f32.mxu0 0.0
    %202 = vmatmul.mubr.f32.gmra.mrb[0].mxu0 %v136
    %v203 = vpop.f32.mrb[0].mxu0
    %v204 = vadd.f32 0.0, %v203
    %v205 = vpop.f32.mrb[0].mxu0
    %206 = vdwg.mxu0
    %v207 = vld [vmem:[%s3] sm:$0x3]
    %v208 = vld [vmem:[#allocation7] sm:$0xff]
    %v209 = vld [vmem:[#allocation7 + $0x8] sm:$0xff]
    %v210 = vld [vmem:[#allocation7 + $0x10] sm:$0xff]
    %v211 = vld [vmem:[#allocation7 + $0x18] sm:$0xff]
    %v212 = vld [vmem:[#allocation7 + $0x20] sm:$0xff]
    %v213 = vld [vmem:[#allocation7 + $0x28] sm:$0xff]
    %v214 = vld [vmem:[#allocation7 + $0x30] sm:$0xff]
    %v215 = vld [vmem:[#allocation7 + $0x38] sm:$0xff]
    %v216 = vld [vmem:[#allocation7 + $0x40] sm:$0xff]
    %v217 = vld [vmem:[#allocation7 + $0x48] sm:$0xff]
    %v218 = vld [vmem:[#allocation7 + $0x50] sm:$0xff]
    %v219 = vld [vmem:[#allocation7 + $0x58] sm:$0xff]
    %v220 = vld [vmem:[#allocation7 + $0x60] sm:$0xff]
    %v221 = vld [vmem:[#allocation7 + $0x68] sm:$0xff]
    %v222 = vld [vmem:[#allocation7 + $0x70] sm:$0xff]
    %v223 = vld [vmem:[#allocation7 + $0x78] sm:$0xff]
    %v224 = vrot.slane %v204, 4
    %v225 = vadd.f32 %v204, %v224
    %v226 = vrot.slane %v225, 2
    %v227 = vadd.f32 %v225, %v226
    %v228 = vrot.slane %v227, 1
    %v229 = vadd.f32 %v227, %v228
    %v230 = vmul.f32 %v229, 0.125
    %v231 = vmul.f32 %v204, %v204
    %v232 = vrot.slane %v231, 4
    %v233 = vadd.f32 %v231, %v232
    %v234 = vrot.slane %v233, 2
    %v235 = vadd.f32 %v233, %v234
    %v236 = vrot.slane %v235, 1
    %v237 = vadd.f32 %v235, %v236
    %v238 = vmul.f32 %v237, 0.125
    %v239 = vmul.f32 %v230, %v230
    %v240 = vsub.f32 %v238, %v239
    %v241 = vmax.f32 %v240, 0.0
    %v242 = vadd.f32 %v241, 1e-05
    %v243 = vrsqrt.pop %v242
    %v244 = vmul.f32 %v207, %v243
    %v245 = vmul.f32 %v230, %v244
    %v247 = vrot.slane %v245, 7
    %v249 = vsub.f32 %v207, %v247
    %v250 = vlaneseq
    %v251 = vshrl.u32 %v250, 7
    %v252 = vsub.s32 0, %v251
    %v253 = vrot.slane %v244, %v252
    %v254 = vmul.f32 %v204, %v253
    %v255 = vlaneseq
    %v256 = vshrl.u32 %v255, 7
    %v257 = vsub.s32 1, %v256
    %v258 = vrot.slane %v249, %v257
    %v259 = vadd.f32 %v254, %v258
    %v260 = vmax.f32 %v259, 0.0
    %261 = vmatprep.subr.mxu0 0.0
    %262 = vmatpush1.msra.mxu0 %v208
    %263 = vmatprep.subr.mxu0 0.0
    %264 = vmatpush1.msra.mxu0 %v209
    %265 = vmatprep.subr.mxu0 0.0
    %266 = vmatpush1.msra.mxu0 %v210
    %267 = vmatprep.subr.mxu0 0.0
    %268 = vmatpush1.msra.mxu0 %v211
    %269 = vmatprep.subr.mxu0 0.0
    %270 = vmatpush1.msra.mxu0 %v212
    %271 = vmatprep.subr.mxu0 0.0
    %272 = vmatpush1.msra.mxu0 %v213
    %273 = vmatprep.subr.mxu0 0.0
    %274 = vmatpush1.msra.mxu0 %v214
    %275 = vmatprep.subr.mxu0 0.0
    %276 = vmatpush1.msra.mxu0 %v215
    %277 = vmatprep.subr.mxu0 0.0
    %278 = vmatpush1.msra.mxu0 %v216
    %279 = vmatprep.subr.mxu0 0.0
    %280 = vmatpush1.msra.mxu0 %v217
    %281 = vmatprep.subr.mxu0 0.0
    %282 = vmatpush1.msra.mxu0 %v218
    %283 = vmatprep.subr.mxu0 0.0
    %284 = vmatpush1.msra.mxu0 %v219
    %285 = vmatprep.subr.mxu0 0.0
    %286 = vmatpush1.msra.mxu0 %v220
    %287 = vmatprep.subr.mxu0 0.0
    %288 = vmatpush1.msra.mxu0 %v221
    %289 = vmatprep.subr.mxu0 0.0
    %290 = vmatpush1.msra.mxu0 %v222
    %291 = vmatprep.subr.mxu0 0.0
    %292 = vmatpush1.msra.mxu0 %v223
    %293 = vmatprep.subr.mxu0 0.0
    %294 = vmatpush1.msra.mxu0 0.0
    %295 = vmatprep.subr.mxu0 0.0
    %296 = vmatpush1.msra.mxu0 0.0
    %297 = vmatprep.subr.mxu0 0.0
    %298 = vmatpush1.msra.mxu0 0.0
    %299 = vmatprep.subr.mxu0 0.0
    %300 = vmatpush1.msra.mxu0 0.0
    %301 = vmatprep.subr.mxu0 0.0
    %302 = vmatpush1.msra.mxu0 0.0
    %303 = vmatprep.subr.mxu0 0.0
    %304 = vmatpush1.msra.mxu0 0.0
    %305 = vmatprep.subr.mxu0 0.0
    %306 = vmatpush1.msra.mxu0 0.0
    %307 = vmatprep.subr.mxu0 0.0
    %308 = vmatpush1.msra.mxu0 0.0
    %309 = vmatprep.subr.mxu0 0.0
    %310 = vmatpush1.msra.mxu0 0.0
    %311 = vmatprep.subr.mxu0 0.0
    %312 = vmatpush1.msra.mxu0 0.0
    %313 = vmatprep.subr.mxu0 0.0
    %314 = vmatpush1.msra.mxu0 0.0
    %315 = vmatprep.subr.mxu0 0.0
    %316 = vmatpush1.msra.mxu0 0.0
    %317 = vmatprep.subr.mxu0 0.0
    %318 = vmatpush1.msra.mxu0 0.0
    %319 = vmatprep.subr.mxu0 0.0
    %320 = vmatpush1.msra.mxu0 0.0
    %321 = vmatprep.subr.mxu0 0.0
    %322 = vmatpush1.msra.mxu0 0.0
    %323 = vmatprep.subr.mxu0 0.0
    %324 = vmatpush1.msra.mxu0 0.0
    %325 = vmatprep.mubr.f32.mxu0 0.0
    %326 = vmatmul.mubr.f32.gmra.mrb[0].mxu0 %v260
    %v327 = vpop.f32.mrb[0].mxu0
    %v328 = vadd.f32 0.0, %v327
    %v329 = vpop.f32.mrb[0].mxu0
    %330 = vdwg.mxu0
    %v331 = vld [vmem:[%s5] sm:$0x3]
    %v332 = vld [vmem:[#allocation8] sm:$0xff]
    %v333 = vld [vmem:[#allocation8 + $0x8] sm:$0xff]
    %v334 = vld [vmem:[#allocation8 + $0x10] sm:$0xff]
    %v335 = vld [vmem:[#allocation8 + $0x18] sm:$0xff]
    %v336 = vld [vmem:[#allocation8 + $0x20] sm:$0xff]
    %v337 = vld [vmem:[#allocation8 + $0x28] sm:$0xff]
    %v338 = vld [vmem:[#allocation8 + $0x30] sm:$0xff]
    %v339 = vld [vmem:[#allocation8 + $0x38] sm:$0xff]
    %v340 = vld [vmem:[#allocation8 + $0x40] sm:$0xff]
    %v341 = vld [vmem:[#allocation8 + $0x48] sm:$0xff]
    %v342 = vld [vmem:[#allocation8 + $0x50] sm:$0xff]
    %v343 = vld [vmem:[#allocation8 + $0x58] sm:$0xff]
    %v344 = vld [vmem:[#allocation8 + $0x60] sm:$0xff]
    %v345 = vld [vmem:[#allocation8 + $0x68] sm:$0xff]
    %v346 = vld [vmem:[#allocation8 + $0x70] sm:$0xff]
    %v347 = vld [vmem:[#allocation8 + $0x78] sm:$0xff]
    %v348 = vrot.slane %v328, 4
    %v349 = vadd.f32 %v328, %v348
    %v350 = vrot.slane %v349, 2
    %v351 = vadd.f32 %v349, %v350
    %v352 = vrot.slane %v351, 1
    %v353 = vadd.f32 %v351, %v352
    %v354 = vmul.f32 %v353, 0.125
    %v355 = vmul.f32 %v328, %v328
    %v356 = vrot.slane %v355, 4
    %v357 = vadd.f32 %v355, %v356
    %v358 = vrot.slane %v357, 2
    %v359 = vadd.f32 %v357, %v358
    %v360 = vrot.slane %v359, 1
    %v361 = vadd.f32 %v359, %v360
    %v362 = vmul.f32 %v361, 0.125
    %v363 = vmul.f32 %v354, %v354
    %v364 = vsub.f32 %v362, %v363
    %v365 = vmax.f32 %v364, 0.0
    %v366 = vadd.f32 %v365, 1e-05
    %v367 = vrsqrt.pop %v366
    %v368 = vmul.f32 %v331, %v367
    %v369 = vmul.f32 %v354, %v368
    %v371 = vrot.slane %v369, 7
    %v373 = vsub.f32 %v331, %v371
    %v374 = vlaneseq
    %v375 = vshrl.u32 %v374, 7
    %v376 = vsub.s32 0, %v375
    %v377 = vrot.slane %v368, %v376
    %v378 = vmul.f32 %v328, %v377
    %v379 = vlaneseq
    %v380 = vshrl.u32 %v379, 7
    %v381 = vsub.s32 1, %v380
    %v382 = vrot.slane %v373, %v381
    %v383 = vadd.f32 %v378, %v382
    %v384 = vmax.f32 %v383, 0.0
    %v385 = vld [vmem:[%s7] sm:$0x1]
    %v387 = vlaneseq
    %v388 = vshrl.u32 %v387, 7
    %v389 = vsub.s32 0, %v388
    %v390 = vrot.slane %v385, %v389
    %392 = vmatprep.subr.mxu0 0.0
    %393 = vmatpush1.msra.mxu0 %v332
    %394 = vmatprep.subr.mxu0 0.0
    %395 = vmatpush1.msra.mxu0 %v333
    %396 = vmatprep.subr.mxu0 0.0
    %397 = vmatpush1.msra.mxu0 %v334
    %398 = vmatprep.subr.mxu0 0.0
    %399 = vmatpush1.msra.mxu0 %v335
    %400 = vmatprep.subr.mxu0 0.0
    %401 = vmatpush1.msra.mxu0 %v336
    %402 = vmatprep.subr.mxu0 0.0
    %403 = vmatpush1.msra.mxu0 %v337
    %404 = vmatprep.subr.mxu0 0.0
    %405 = vmatpush1.msra.mxu0 %v338
    %406 = vmatprep.subr.mxu0 0.0
    %407 = vmatpush1.msra.mxu0 %v339
    %408 = vmatprep.subr.mxu0 0.0
    %409 = vmatpush1.msra.mxu0 %v340
    %410 = vmatprep.subr.mxu0 0.0
    %411 = vmatpush1.msra.mxu0 %v341
    %412 = vmatprep.subr.mxu0 0.0
    %413 = vmatpush1.msra.mxu0 %v342
    %414 = vmatprep.subr.mxu0 0.0
    %415 = vmatpush1.msra.mxu0 %v343
    %416 = vmatprep.subr.mxu0 0.0
    %417 = vmatpush1.msra.mxu0 %v344
    %418 = vmatprep.subr.mxu0 0.0
    %419 = vmatpush1.msra.mxu0 %v345
    %420 = vmatprep.subr.mxu0 0.0
    %421 = vmatpush1.msra.mxu0 %v346
    %422 = vmatprep.subr.mxu0 0.0
    %423 = vmatpush1.msra.mxu0 %v347
    %424 = vmatprep.subr.mxu0 0.0
    %425 = vmatpush1.msra.mxu0 0.0
    %426 = vmatprep.subr.mxu0 0.0
    %427 = vmatpush1.msra.mxu0 0.0
    %428 = vmatprep.subr.mxu0 0.0
    %429 = vmatpush1.msra.mxu0 0.0
    %430 = vmatprep.subr.mxu0 0.0
    %431 = vmatpush1.msra.mxu0 0.0
    %432 = vmatprep.subr.mxu0 0.0
    %433 = vmatpush1.msra.mxu0 0.0
    %434 = vmatprep.subr.mxu0 0.0
    %435 = vmatpush1.msra.mxu0 0.0
    %436 = vmatprep.subr.mxu0 0.0
    %437 = vmatpush1.msra.mxu0 0.0
    %438 = vmatprep.subr.mxu0 0.0
    %439 = vmatpush1.msra.mxu0 0.0
    %440 = vmatprep.subr.mxu0 0.0
    %441 = vmatpush1.msra.mxu0 0.0
    %442 = vmatprep.subr.mxu0 0.0
    %443 = vmatpush1.msra.mxu0 0.0
    %444 = vmatprep.subr.mxu0 0.0
    %445 = vmatpush1.msra.mxu0 0.0
    %446 = vmatprep.subr.mxu0 0.0
    %447 = vmatpush1.msra.mxu0 0.0
    %448 = vmatprep.subr.mxu0 0.0
    %449 = vmatpush1.msra.mxu0 0.0
    %450 = vmatprep.subr.mxu0 0.0
    %451 = vmatpush1.msra.mxu0 0.0
    %452 = vmatprep.subr.mxu0 0.0
    %453 = vmatpush1.msra.mxu0 0.0
    %454 = vmatprep.subr.mxu0 0.0
    %455 = vmatpush1.msra.mxu0 0.0
    %456 = vmatprep.mubr.f32.mxu0 0.0
    %457 = vmatmul.mubr.f32.gmra.mrb[0].mxu0 %v384
    %v458 = vpop.f32.mrb[0].mxu0
    %v459 = vadd.f32 %v390, %v458
    %v460 = vpop.f32.mrb[0].mxu0
    %461 = vdwg.mxu0
    %v462 = vmax.f32 %v459, 0.0
    %463 = vst [vmem:[#allocation10] sm:$0xff] %v462
    // Predicated region
    $region50: #{tpu_custom_call.1} parent=1 // pred_check
      _
    $region51: #{tpu_custom_call.1} parent=1 // pred_check_branch
      %465 = sbr.rel (0) target = $region53
    $region52: #{tpu_custom_call.1} parent=1 // pred_region
      %s467 = ssub.s32 128, 128
      %468 = vsyncadd [#allocation4], %s467
      %s470 = sshll.u32 [#allocation10], 4
      %s471 = int_to_ptr.vmem [resolvable:$true] %s470
      %473 = dma.vmem_to_hbm [thread:$0]  %s471, 128, %s8, [#allocation4]
    $region53: #{tpu_custom_call.1} parent=1 // pred_fallthru
      _
    // Predicated region
    $region54: #{tpu_custom_call.1} parent=1 // pred_check
      _
    $region55: #{tpu_custom_call.1} parent=1 // pred_check_branch
      %475 = sbr.rel (0) target = $region57
    $region56: #{tpu_custom_call.1} parent=1 // pred_region
      %476 = dma.done [#allocation4], 128
    $region57: #{tpu_custom_call.1} parent=1 // pred_fallthru
      _
    %477 = vsyncpa [#allocation3], 1
    %478 = vsyncpa [#allocation6], 1
    %479 = vsyncpa [#allocation9], 1
    %480 = vsyncpa [#allocation4], 1

</llo_original>
